<compile_context>
chip_gen: v5e
topology: v5e:2x2
jax: 0.10.0
libtpu: 0.0.40
codegen_flags: <defaults>
</compile_context>

<pallas_src>
import functools

import jax
import jax.numpy as jnp
from jax import lax
from jax.experimental import pallas as pl
from jax.experimental.pallas import tpu as pltpu


def _round_up(x, m):
    return ((x + m - 1) // m) * m


def _lsce_kernel(x_ref, tgt_ref, smooth_ref, nll_ref, *, num_classes,
                 ignore_index):
    """Per-sample label-smoothing CE terms for one batch tile.

    x_ref:      (n_tile, C) logits (any float dtype; upcast per tile)
    tgt_ref:    (n_tile, 1) int32 targets
    smooth_ref: (n_tile, 1) f32   -sum_j log_softmax(x)_j
    nll_ref:    (n_tile, 1) f32   -log_softmax(x)[target] (0 for ignore_index)
    """
    x = x_ref[...].astype(jnp.float32)                      # (n_tile, C)
    tgt = tgt_ref[...]                                       # (n_tile, 1)

    # --- logsumexp along the class (lane) axis -------------------------------
    x_max = jnp.max(x, axis=-1, keepdims=True)               # (n_tile, 1)
    sum_exp = jnp.sum(jnp.exp(x - x_max), axis=-1, keepdims=True)
    lse = x_max + jnp.log(sum_exp)                           # (n_tile, 1)

    # --- smoothing term: -sum_j (x_j - lse) = C*lse - sum_j x_j ---------------
    sum_x = jnp.sum(x, axis=-1, keepdims=True)
    smooth_ref[...] = num_classes * lse - sum_x

    # --- NLL term: lse - x[target]  (pick raw logit via integer onehot) ------
    class_id = lax.broadcasted_iota(jnp.int32, x.shape, 1)   # (n_tile, C)
    picked = jnp.sum(jnp.where(class_id == tgt, x, 0.0), axis=-1, keepdims=True)
    valid = tgt != ignore_index
    nll_ref[...] = jnp.where(valid, lse - picked, 0.0)


def label_smoothing_cross_entropy(output, target, eps=0.1, reduction="mean",
                                  ignore_index=-100):
    """Pallas-backed equivalent of LabelSmoothingCrossEntropy.forward."""
    if reduction not in ("none", "sum", "mean"):
        raise ValueError(f"invalid reduction: {reduction}")
    n, c = output.shape

    itemsize = jnp.dtype(output.dtype).itemsize
    sub = {4: 8, 2: 16, 1: 32}.get(itemsize, 8)   # sublane multiple per dtype
    c_pad = _round_up(c, 128)                     # lane-padded width in VMEM

    # Generation-aware VMEM budgeting (v7x: 64 MiB/TC; v5e/v6e: 128 MiB).
    try:
        vmem_cap = int(pltpu.get_tpu_info().vmem_capacity_bytes)
    except Exception:  # not on a TPU / introspection unavailable
        vmem_cap = 64 * 1024 * 1024

    # Batch tile (sublane axis): ~2-4 MiB per pipelined input buffer.
    per_buf_budget = min(4 * 1024 * 1024, vmem_cap // 16)
    rows_fit = max(sub, (per_buf_budget // (c_pad * itemsize)) // sub * sub)
    n_tile = min(rows_fit, 2048, _round_up(n, sub))
    if n_tile >= n and n >= 2 * sub:
        # Split single-tile batches so both v7x TensorCores get work.
        n_tile = _round_up((n + 1) // 2, sub)
    grid = pl.cdiv(n, n_tile)
    # TODO(synk): very large class counts (c_pad * n_tile * 4 >> VMEM) would
    # need a second grid axis over classes with an online logsumexp.

    tgt2d = target.astype(jnp.int32).reshape(n, 1)

    tile_in_bytes = c_pad * n_tile * itemsize
    tile_f32_bytes = c_pad * n_tile * 4
    vmem_limit = int(min(vmem_cap * 3 // 4,
                         max(32 * 1024 * 1024,
                             2 * tile_in_bytes + 6 * tile_f32_bytes)))

    kernel = functools.partial(_lsce_kernel, num_classes=c,
                               ignore_index=ignore_index)

    smooth2d, nll2d = pl.pallas_call(
        kernel,
        out_shape=(jax.ShapeDtypeStruct((n, 1), jnp.float32),
                   jax.ShapeDtypeStruct((n, 1), jnp.float32)),
        grid_spec=pltpu.PrefetchScalarGridSpec(
            num_scalar_prefetch=0,
            grid=(grid,),
            in_specs=[pl.BlockSpec((n_tile, c), lambda i: (i, 0)),
                      pl.BlockSpec((n_tile, 1), lambda i: (i, 0))],
            out_specs=[pl.BlockSpec((n_tile, 1), lambda i: (i, 0)),
                       pl.BlockSpec((n_tile, 1), lambda i: (i, 0))]),
        compiler_params=pltpu.CompilerParams(
            dimension_semantics=("parallel",),
            vmem_limit_bytes=vmem_limit),
    )(output, tgt2d)

    smooth = smooth2d[:, 0]                       # (n,)
    nll = nll2d[:, 0]                             # (n,)

    if reduction == "none":
        return smooth * (eps / c) + (1.0 - eps) * nll
    if reduction == "sum":
        return jnp.sum(smooth) * (eps / c) + (1.0 - eps) * jnp.sum(nll)
    # 'mean' (NaN if every target == ignore_index, matching F.nll_loss)
    n_valid = jnp.sum((target.astype(jnp.int32) != ignore_index)
                      .astype(jnp.float32))
    return (jnp.mean(smooth) * (eps / c)
            + (1.0 - eps) * (jnp.sum(nll) / n_valid))


# ------------- pure-JAX reference (mirrors the PyTorch module) ---------------
def lsce_ref(output, target, eps=0.1, reduction="mean", ignore_index=-100):
    n, c = output.shape
    logp = jax.nn.log_softmax(output.astype(jnp.float32), axis=-1)
    valid = target != ignore_index
    safe_t = jnp.where(valid, target, 0).astype(jnp.int32)
    nll_each = -jnp.take_along_axis(logp, safe_t[:, None], axis=-1)[:, 0]
    nll_each = jnp.where(valid, nll_each, 0.0)
    smooth_each = -jnp.sum(logp, axis=-1)
    if reduction == "sum":
        smooth_term, nll_term = jnp.sum(smooth_each), jnp.sum(nll_each)
    elif reduction == "mean":
        smooth_term = jnp.mean(smooth_each)
        nll_term = jnp.sum(nll_each) / jnp.sum(valid.astype(jnp.float32))
    else:
        smooth_term, nll_term = smooth_each, nll_each
    return smooth_term * (eps / c) + (1.0 - eps) * nll_term


if __name__ == "__main__":
    key = jax.random.PRNGKey(0)
    k1, k2, k3, k4, k5, k6 = jax.random.split(key, 6)

    # small case: exercises ignore_index and a tiny single-block grid
    n1, c1 = 8, 10
    logits1 = jax.random.normal(k1, (n1, c1), dtype=jnp.float32) * 2.0
    target1 = jax.random.randint(k2, (n1,), 0, c1, dtype=jnp.int32)
    target1 = target1.at[3].set(-100)

    # larger case: multiple batch tiles + ragged last tile, non-128 class dim
    n2, c2 = 600, 37
    logits2 = jax.random.normal(k3, (n2, c2), dtype=jnp.float32) * 3.0
    target2 = jax.random.randint(k4, (n2,), 0, c2, dtype=jnp.int32)
    target2 = target2.at[::17].set(-100)

    # bf16 ingestion case: upcast happens in-kernel, halving HBM read bytes
    n3, c3 = 256, 200
    logits3 = (jax.random.normal(k5, (n3, c3), dtype=jnp.float32) * 2.0
               ).astype(jnp.bfloat16)
    target3 = jax.random.randint(k6, (n3,), 0, c3, dtype=jnp.int32)

    for lg, tg in ((logits1, target1), (logits2, target2), (logits3, target3)):
        is_bf16 = lg.dtype == jnp.bfloat16
        atol = 1e-2 if is_bf16 else 1e-4
        rtol = 1e-3 if is_bf16 else 1e-4
        for reduction in ("mean", "sum", "none"):
            got = label_smoothing_cross_entropy(lg, tg, eps=0.1,
                                                reduction=reduction)
            got = jax.block_until_ready(got)
            want = lsce_ref(lg, tg, eps=0.1, reduction=reduction)
            assert jnp.allclose(got, want, atol=atol, rtol=rtol), (
                reduction, lg.dtype, got, want)

    print("KERNEL_OK")
</pallas_src>

<mosaic_0001>
module attributes {stable_mosaic.version = 11 : i64} {
  func.func @_lsce_kernel(%arg0: i32, %arg1: memref<8x10xf32, #tpu.memory_space<vmem>>, %arg2: memref<8x1xi32, #tpu.memory_space<vmem>>, %arg3: memref<8x1xf32, #tpu.memory_space<vmem>>, %arg4: memref<8x1xf32, #tpu.memory_space<vmem>>) attributes {dimension_semantics = [#tpu.dimension_semantics<parallel>], iteration_bounds = array<i64: 1>, scalar_prefetch = 0 : i64, scratch_operands = 0 : i64, tpu.core_type = #tpu.core_type<tc>, window_params = [{transform_indices = @transform_0, window_bounds = array<i64: 8, 10>}, {transform_indices = @transform_1, window_bounds = array<i64: 8, 1>}, {transform_indices = @transform_2, window_bounds = array<i64: 8, 1>}, {transform_indices = @transform_3, window_bounds = array<i64: 8, 1>}]} {
    %c0 = arith.constant 0 : index
    %c0_0 = arith.constant 0 : index
    %0 = vector.load %arg1[%c0, %c0_0] : memref<8x10xf32, #tpu.memory_space<vmem>>, vector<8x10xf32>
    %c0_1 = arith.constant 0 : index
    %c0_2 = arith.constant 0 : index
    %1 = vector.load %arg2[%c0_1, %c0_2] : memref<8x1xi32, #tpu.memory_space<vmem>>, vector<8x1xi32>
    %cst = arith.constant dense<0xFF800000> : vector<8xf32>
    %2 = vector.multi_reduction <maximumf>, %0, %cst [1] : vector<8x10xf32> to vector<8xf32>
    %3 = vector.shape_cast %2 : vector<8xf32> to vector<8x1xf32>
    %4 = vector.broadcast %3 : vector<8x1xf32> to vector<8x10xf32>
    %5 = arith.subf %0, %4 : vector<8x10xf32>
    %6 = math.exp %5 : vector<8x10xf32>
    %cst_3 = arith.constant dense<0.000000e+00> : vector<8xf32>
    %7 = vector.multi_reduction <add>, %6, %cst_3 [1] : vector<8x10xf32> to vector<8xf32>
    %8 = vector.shape_cast %7 : vector<8xf32> to vector<8x1xf32>
    %9 = math.log %8 : vector<8x1xf32>
    %10 = arith.addf %3, %9 : vector<8x1xf32>
    %cst_4 = arith.constant dense<0.000000e+00> : vector<8xf32>
    %11 = vector.multi_reduction <add>, %0, %cst_4 [1] : vector<8x10xf32> to vector<8xf32>
    %12 = vector.shape_cast %11 : vector<8xf32> to vector<8x1xf32>
    %cst_5 = arith.constant 1.000000e+01 : f32
    %13 = vector.broadcast %cst_5 : f32 to vector<8x1xf32>
    %14 = arith.mulf %13, %10 : vector<8x1xf32>
    %15 = arith.subf %14, %12 : vector<8x1xf32>
    %c0_6 = arith.constant 0 : index
    %c0_7 = arith.constant 0 : index
    %16 = vector.load %arg3[%c0_6, %c0_7] : memref<8x1xf32, #tpu.memory_space<vmem>>, vector<8x1xf32>
    tpu.vector_store %arg3[%c0_6, %c0_7], %15 {strides = array<i32>} : memref<8x1xf32, #tpu.memory_space<vmem>>, vector<8x1xf32>,
    %17 = tpu.iota {dimensions = array<i32: 1>} : vector<8x10xi32>
    %18 = vector.broadcast %1 : vector<8x1xi32> to vector<8x10xi32>
    %19 = arith.cmpi eq, %17, %18 : vector<8x10xi32>
    %cst_8 = arith.constant 0.000000e+00 : f32
    %20 = vector.broadcast %cst_8 : f32 to vector<8x10xf32>
    %21 = arith.select %19, %0, %20 : vector<8x10xi1>, vector<8x10xf32>
    %cst_9 = arith.constant dense<0.000000e+00> : vector<8xf32>
    %22 = vector.multi_reduction <add>, %21, %cst_9 [1] : vector<8x10xf32> to vector<8xf32>
    %23 = vector.shape_cast %22 : vector<8xf32> to vector<8x1xf32>
    %c-100_i32 = arith.constant -100 : i32
    %24 = vector.broadcast %c-100_i32 : i32 to vector<8x1xi32>
    %25 = arith.cmpi ne, %1, %24 : vector<8x1xi32>
    %26 = arith.subf %10, %23 : vector<8x1xf32>
    %cst_10 = arith.constant 0.000000e+00 : f32
    %27 = vector.broadcast %cst_10 : f32 to vector<8x1xf32>
    %28 = arith.select %25, %26, %27 : vector<8x1xi1>, vector<8x1xf32>
    %c0_11 = arith.constant 0 : index
    %c0_12 = arith.constant 0 : index
    %29 = vector.load %arg4[%c0_11, %c0_12] : memref<8x1xf32, #tpu.memory_space<vmem>>, vector<8x1xf32>
    tpu.vector_store %arg4[%c0_11, %c0_12], %28 {strides = array<i32>} : memref<8x1xf32, #tpu.memory_space<vmem>>, vector<8x1xf32>,
    return
  }
  func.func @transform_0(%arg0: i32) -> (i32, i32) {
    %c0_i32 = arith.constant 0 : i32
    %c0_i32_0 = arith.constant 0 : i32
    return %arg0, %c0_i32 : i32, i32
  }
  func.func @transform_1(%arg0: i32) -> (i32, i32) {
    %c0_i32 = arith.constant 0 : i32
    %c0_i32_0 = arith.constant 0 : i32
    return %arg0, %c0_i32 : i32, i32
  }
  func.func @transform_2(%arg0: i32) -> (i32, i32) {
    %c0_i32 = arith.constant 0 : i32
    %c0_i32_0 = arith.constant 0 : i32
    return %arg0, %c0_i32 : i32, i32
  }
  func.func @transform_3(%arg0: i32) -> (i32, i32) {
    %c0_i32 = arith.constant 0 : i32
    %c0_i32_0 = arith.constant 0 : i32
    return %arg0, %c0_i32 : i32, i32
  }
}

</mosaic_0001>

<llo_original>
// kernel: tpu_custom_call.1
$region0: #{tpu_custom_call.1}
  #allocation0 [shape = 'u32[]', space=smem, size = 0x4, offset = 0x4, fixed_abs, tag = 'smem constant byte address 0x4 - core index']
  #allocation1 [shape = 'u32[72,128]{1,0:T(1,128)}', space=vmem, size = 0x9000, scoped, tag = 'internal scratch']
  %s0 = inlined_call_operand.vmem [shape: f32[8,10], index: 0, kind: input, shape index: {}]
  %s1 = inlined_call_operand.vmem [shape: s32[8,1], index: 1, kind: input, shape index: {}]
  %s2 = inlined_call_operand.vmem [shape: f32[8,1], index: 2, kind: output, shape index: {0}]
  %s3 = inlined_call_operand.vmem [shape: f32[8,1], index: 3, kind: output, shape index: {1}]
  %4 = xla_tuple %s2, %s3
  %s5 = sld [smem:[#allocation0]]
  $region26: #{tpu_custom_call.1} parent=0
    _
  %s7 = ssub.s32 1, %s5
  %s8 = scalar_select 0, %s7, %s5
  // Predicated region
  $region2: #{tpu_custom_call.1} parent=0 // pred_check
    _
  $region3: #{tpu_custom_call.1} parent=0 // pred_check_branch
    %10 = sbr.rel (0) target = $region5
  $region4: #{tpu_custom_call.1} parent=0 // pred_region
    _
  $region5: #{tpu_custom_call.1} parent=0 // pred_fallthru
    _
  // Predicated region
  $region6: #{tpu_custom_call.1} parent=0 // pred_check
    _
  $region7: #{tpu_custom_call.1} parent=0 // pred_check_branch
    %12 = sbr.rel (0) target = $region9
  $region8: #{tpu_custom_call.1} parent=0 // pred_region
    _
  $region9: #{tpu_custom_call.1} parent=0 // pred_fallthru
    _
  %v13 = vld [vmem:[%s0] sm:$0xff]
  %v14 = vld [vmem:[%s1] sm:$0xff]
  %vm15 = vcmask 80896
  %v16 = vsel %vm15, %v13, -inf
  %17 = vmax.xlane.f32.xlu0 %v16
  %v18 = vpop.xlane.xlu0 %17
  %v19 = vsub.f32 %v13, %v18
  %v20 = vmul.f32 %v19, 1.442695
  %v21 = vpow.pop %v20
  %v22 = vsel %vm15, %v21, 0.0
  %23 = vadd.xlane.f32.xlu0 %v22
  %v24 = vpop.xlane.xlu0 %23
  %v25 = vlog2.pop %v24
  %v26 = vmul.f32 %v25, 0.6931472
  %v27 = vadd.f32 %v18, %v26
  %v28 = vsel %vm15, %v13, 0.0
  %29 = vadd.xlane.f32.xlu0 %v28
  %v30 = vpop.xlane.xlu0 %29
  %v31 = vmul.f32 %v27, 10.0
  %v32 = vsub.f32 %v31, %v30
  %vm33 = vcmask 7168
  %34 = vst.msk [vmem:[%s2] sm:$0xff] %vm33, %v32
  %v35 = vlaneseq
  %v36 = vand.u32 %v35, 127
  %37 = vset.pattern.permute.xlu0 0
  %38 = vperm.xlu0 %37, %v14
  %v39 = vpop.permute.xlu0 %38
  %vm40 = vcmp.eq.s32.totalorder %v36, %v39
  %v41 = vsel %vm40, %v13, 0.0
  %v42 = vsel %vm15, %v41, 0.0
  %43 = vadd.xlane.f32.xlu0 %v42
  %v44 = vpop.xlane.xlu0 %43
  %vm45 = vcmp.ne.s32.totalorder %v14, 4294967196
  %v46 = vsub.f32 %v27, %v44
  %v47 = vsel %vm45, %v46, 0.0
  %48 = vst.msk [vmem:[%s3] sm:$0xff] %vm33, %v47
  // Predicated region
  $region10: #{tpu_custom_call.1} parent=0 // pred_check
    _
  $region11: #{tpu_custom_call.1} parent=0 // pred_check_branch
    %50 = sbr.rel (0) target = $region13
  $region12: #{tpu_custom_call.1} parent=0 // pred_region
    _
  $region13: #{tpu_custom_call.1} parent=0 // pred_fallthru
    _
  // Predicated region
  $region14: #{tpu_custom_call.1} parent=0 // pred_check
    _
  $region15: #{tpu_custom_call.1} parent=0 // pred_check_branch
    %52 = sbr.rel (0) target = $region17
  $region16: #{tpu_custom_call.1} parent=0 // pred_region
    _
  $region17: #{tpu_custom_call.1} parent=0 // pred_fallthru
    _
  // Predicated region
  $region18: #{tpu_custom_call.1} parent=0 // pred_check
    _
  $region19: #{tpu_custom_call.1} parent=0 // pred_check_branch
    %54 = sbr.rel (0) target = $region21
  $region20: #{tpu_custom_call.1} parent=0 // pred_region
    _
  $region21: #{tpu_custom_call.1} parent=0 // pred_fallthru
    _
  // Predicated region
  $region22: #{tpu_custom_call.1} parent=0 // pred_check
    _
  $region23: #{tpu_custom_call.1} parent=0 // pred_check_branch
    %56 = sbr.rel (0) target = $region25
  $region24: #{tpu_custom_call.1} parent=0 // pred_region
    _
  $region25: #{tpu_custom_call.1} parent=0 // pred_fallthru
    _

</llo_original>
